<compile_context>
chip_gen: v5e
topology: v5e:2x2
jax: 0.10.0
libtpu: 0.0.40
codegen_flags: <defaults>
</compile_context>

<pallas_src>
import functools

import jax
import jax.numpy as jnp
from jax import lax
from jax.experimental import pallas as pl
from jax.experimental.pallas import tpu as pltpu


# Contract the LAST axis of both operands (x @ w.T without an explicit
# transpose -> no relayout before the MXU push).
_CONTRACT_LAST = (((1,), (1,)), ((), ()))


# ----------------------------- Pallas kernels ------------------------------

def _qkv_proj_kernel(x_ref, w_ref, q_ref, k_ref, v_ref, *, inner_dim):
    # x_ref: (1, tm, dim) bf16, w_ref: (3*inner_dim, dim) bf16
    # q/k/v_ref: (1, tm, inner_dim) bf16.
    # Three separate dots against sublane-aligned row-blocks of W (the torch
    # .chunk(3)) -> each result is already lane-aligned at 0, no column-split
    # relayout of one wide (tm, 3*inner) result.
    x = x_ref[0]
    for i, out in enumerate((q_ref, k_ref, v_ref)):
        w = w_ref[i * inner_dim:(i + 1) * inner_dim, :]       # (inner, dim)
        y = lax.dot_general(x, w, _CONTRACT_LAST,
                            preferred_element_type=jnp.float32)
        out[0] = y.astype(out.dtype)


def _flash_attn_kernel(*refs, num_heads, head_dim, project_out):
    # project_out=True : q, k, v, w_out, b_out, o, m, l, acc
    # project_out=False: q, k, v, o, m, l, acc
    if project_out:
        q_ref, k_ref, v_ref, w_ref, b_ref, o_ref, m_sc, l_sc, acc_sc = refs
    else:
        q_ref, k_ref, v_ref, o_ref, m_sc, l_sc, acc_sc = refs
        w_ref = b_ref = None

    # q_ref: (1, tq, H*hd) bf16 (scale pre-folded into W_q rows)
    # k/v_ref: (1, tk, H*hd) bf16
    # Scratch (persists across the kv grid axis):
    #   m_sc, l_sc: (H, tq, 1) f32; acc_sc: (tq, H*hd) f32 (lane-dense).
    ki = pl.program_id(2)

    @pl.when(ki == 0)
    def _init():
        m_sc[...] = jnp.full(m_sc.shape, -jnp.inf, jnp.float32)
        l_sc[...] = jnp.zeros(l_sc.shape, jnp.float32)
        acc_sc[...] = jnp.zeros(acc_sc.shape, jnp.float32)

    # All heads of this (batch, q-tile) handled in one invocation; per-head
    # slices are static column windows of the lane-dense qkv slabs.
    for h in range(num_heads):
        sl = slice(h * head_dim, (h + 1) * head_dim)
        q = q_ref[0, :, sl]                              # (tq, hd) bf16
        k = k_ref[0, :, sl]                              # (tk, hd) bf16
        v = v_ref[0, :, sl]                              # (tk, hd) bf16

        # q @ k^T via contracting dims -> bf16 MXU, f32 accumulate.
        s = lax.dot_general(q, k, _CONTRACT_LAST,
                            preferred_element_type=jnp.float32)   # (tq, tk)

        m_prev = m_sc[h]                                           # (tq, 1)
        m_new = jnp.maximum(m_prev, jnp.max(s, axis=-1, keepdims=True))
        alpha = jnp.exp(m_prev - m_new)                 # f32 softmax state
        p = jnp.exp(s - m_new)                          # (tq, tk) f32
        l_sc[h] = alpha * l_sc[h] + jnp.sum(p, axis=-1, keepdims=True)
        pv = jnp.dot(p.astype(jnp.bfloat16), v,          # bf16 MXU operands
                     preferred_element_type=jnp.float32)           # (tq, hd)
        acc_sc[:, sl] = alpha * acc_sc[:, sl] + pv
        m_sc[h] = m_new

    @pl.when(ki == pl.num_programs(2) - 1)
    def _finalize():
        # Normalize in place (exact reciprocal: runs once per (b, q-tile)).
        for h in range(num_heads):
            sl = slice(h * head_dim, (h + 1) * head_dim)
            acc_sc[:, sl] = acc_sc[:, sl] * pl.reciprocal(l_sc[h])
        attn = acc_sc[...]                               # (tq, H*hd), 'b n (h d)'
        if project_out:
            # Fused to_out: attn @ W_out^T + b, straight to HBM output tile.
            y = lax.dot_general(attn.astype(jnp.bfloat16), w_ref[...],
                                _CONTRACT_LAST,
                                preferred_element_type=jnp.float32)
            o_ref[0] = (y + b_ref[...]).astype(o_ref.dtype)
        else:
            o_ref[0] = attn.astype(o_ref.dtype)


# ------------------------------ Pallas wrapper ------------------------------

def _pick_tile(n, pref):
    """Largest multiple-of-8 divisor of n that is <= pref (or n itself)."""
    # TODO(synk): for N with no multiple-of-8 divisor <= pref (e.g. ViT N=197)
    # this falls back to tile=N; pad N / handle ragged tails for long sequences.
    if n <= pref:
        return n
    for t in range(pref, 7, -8):
        if t % 8 == 0 and n % t == 0:
            return t
    return n


def vanilla_self_attention(x, w_qkv, w_out, b_out, *, num_heads, head_dim):
    """Forward pass of VanillaSelfAttention.  x: (B, N, dim)."""
    B, N, dim = x.shape
    inner_dim = num_heads * head_dim
    scale = head_dim ** (-0.5)
    out_dtype = x.dtype
    project_out = w_out is not None   # project_out == False -> nn.Identity

    tm = _pick_tile(N, 256)   # sequence tile for the QKV projection
    tq = _pick_tile(N, 512)   # query tile (K/V HBM re-stream scales with N/tq)
    tk = _pick_tile(N, 256)   # key/value tile (flash reduction axis)

    # Fold the softmax scale into the q rows of W_qkv (trace-time, free) and
    # cast MXU operands / HBM intermediates to bf16 (f32 accumulate in-kernel).
    w_q_scaled = w_qkv[:inner_dim] * jnp.asarray(scale, w_qkv.dtype)
    w_qkv_bf16 = jnp.concatenate([w_q_scaled, w_qkv[inner_dim:]],
                                 axis=0).astype(jnp.bfloat16)
    x_bf16 = x.astype(jnp.bfloat16)

    # --- to_qkv: x @ W_qkv^T, chunked into q, k, v inside the kernel --------
    # TODO(synk): constant-index weight blocks could use
    # pipeline_mode=pl.Buffered(1) to skip double-buffering (minor VMEM win).
    q, k, v = pl.pallas_call(
        functools.partial(_qkv_proj_kernel, inner_dim=inner_dim),
        out_shape=tuple(jax.ShapeDtypeStruct((B, N, inner_dim), jnp.bfloat16)
                        for _ in range(3)),
        grid=(B, N // tm),
        in_specs=[pl.BlockSpec((1, tm, dim), lambda b, i: (b, i, 0)),
                  pl.BlockSpec((3 * inner_dim, dim), lambda b, i: (0, 0))],
        out_specs=[pl.BlockSpec((1, tm, inner_dim), lambda b, i: (b, i, 0)),
                   pl.BlockSpec((1, tm, inner_dim), lambda b, i: (b, i, 0)),
                   pl.BlockSpec((1, tm, inner_dim), lambda b, i: (b, i, 0))],
        compiler_params=pltpu.CompilerParams(
            dimension_semantics=("parallel", "parallel")),
    )(x_bf16, w_qkv_bf16)

    # --- fused attention + output projection ---------------------------------
    in_specs = [
        pl.BlockSpec((1, tq, inner_dim), lambda b, qi, ki: (b, qi, 0)),
        pl.BlockSpec((1, tk, inner_dim), lambda b, qi, ki: (b, ki, 0)),
        pl.BlockSpec((1, tk, inner_dim), lambda b, qi, ki: (b, ki, 0)),
    ]
    args = [q, k, v]
    if project_out:
        in_specs += [pl.BlockSpec((dim, inner_dim), lambda b, qi, ki: (0, 0)),
                     pl.BlockSpec((1, dim), lambda b, qi, ki: (0, 0))]
        args += [w_out.astype(jnp.bfloat16), b_out.astype(jnp.float32)]
        out_cols = dim
    else:
        out_cols = inner_dim

    # TODO(synk): Dropout with p_dropout > 0 (training mode) not implemented;
    # p_dropout=0.0 makes it an identity in the forward pass.
    return pl.pallas_call(
        functools.partial(_flash_attn_kernel, num_heads=num_heads,
                          head_dim=head_dim, project_out=project_out),
        out_shape=jax.ShapeDtypeStruct((B, N, out_cols), out_dtype),
        grid=(B, N // tq, N // tk),
        in_specs=in_specs,
        out_specs=pl.BlockSpec((1, tq, out_cols), lambda b, qi, ki: (b, qi, 0)),
        scratch_shapes=[pltpu.VMEM((num_heads, tq, 1), jnp.float32),   # m
                        pltpu.VMEM((num_heads, tq, 1), jnp.float32),   # l
                        pltpu.VMEM((tq, inner_dim), jnp.float32)],     # acc
        compiler_params=pltpu.CompilerParams(
            dimension_semantics=("parallel", "parallel", "arbitrary")),
    )(*args)


# ------------------------------ reference (JAX) -----------------------------

def _reference(x, w_qkv, w_out, b_out, *, num_heads, head_dim):
    B, N, _ = x.shape
    inner_dim = num_heads * head_dim
    scale = head_dim ** (-0.5)
    qkv = x @ w_qkv.T
    q, k, v = jnp.split(qkv, 3, axis=-1)
    reh = lambda t: t.reshape(B, N, num_heads, head_dim).transpose(0, 2, 1, 3)
    q, k, v = map(reh, (q, k, v))
    dots = jnp.einsum("bhnd,bhmd->bhnm", q, k) * scale
    attn = jax.nn.softmax(dots, axis=-1)
    out = jnp.einsum("bhnm,bhmd->bhnd", attn, v)
    out = out.transpose(0, 2, 1, 3).reshape(B, N, inner_dim)
    return out @ w_out.T + b_out


# ----------------------------------- main -----------------------------------

if __name__ == "__main__":
    # Small, forward-consistent shapes.
    B, N, DIM = 2, 8, 32
    NUM_HEADS, HEAD_DIM = 2, 16
    INNER = NUM_HEADS * HEAD_DIM          # 32; project_out = True

    key = jax.random.PRNGKey(0)
    kx, kq, kw, kb = jax.random.split(key, 4)

    x = jax.random.normal(kx, (B, N, DIM), dtype=jnp.float32)

    # Deterministic parameter init (PyTorch Linear-style uniform bounds).
    bound_qkv = 1.0 / (DIM ** 0.5)
    w_qkv = jax.random.uniform(kq, (3 * INNER, DIM), jnp.float32,
                               -bound_qkv, bound_qkv)
    bound_out = 1.0 / (INNER ** 0.5)
    w_out = jax.random.uniform(kw, (DIM, INNER), jnp.float32,
                               -bound_out, bound_out)
    b_out = jax.random.uniform(kb, (1, DIM), jnp.float32,
                               -bound_out, bound_out)

    y = vanilla_self_attention(x, w_qkv, w_out, b_out,
                               num_heads=NUM_HEADS, head_dim=HEAD_DIM)
    y = jax.block_until_ready(y)

    y_ref = _reference(x, w_qkv, w_out, b_out,
                       num_heads=NUM_HEADS, head_dim=HEAD_DIM)
    assert y.shape == (B, N, DIM)
    # Tolerance accounts for bf16 MXU operands (f32 accumulate) vs the strict
    # f32 reference; the softmax normalization itself uses an exact reciprocal.
    assert jnp.allclose(y, y_ref, atol=2e-2, rtol=2e-2), "mismatch vs reference"

    print("KERNEL_OK")
</pallas_src>

<mosaic_0001>
module attributes {stable_mosaic.version = 11 : i64} {
  func.func @_qkv_proj_kernel(%arg0: i32, %arg1: i32, %arg2: memref<1x8x32xbf16, #tpu.memory_space<vmem>>, %arg3: memref<96x32xbf16, #tpu.memory_space<vmem>>, %arg4: memref<1x8x32xbf16, #tpu.memory_space<vmem>>, %arg5: memref<1x8x32xbf16, #tpu.memory_space<vmem>>, %arg6: memref<1x8x32xbf16, #tpu.memory_space<vmem>>) attributes {dimension_semantics = [#tpu.dimension_semantics<parallel>, #tpu.dimension_semantics<parallel>], iteration_bounds = array<i64: 2, 1>, scalar_prefetch = 0 : i64, scratch_operands = 0 : i64, tpu.core_type = #tpu.core_type<tc>, window_params = [{transform_indices = @transform_0, window_bounds = array<i64: 1, 8, 32>}, {pipeline_mode = #tpu.pipeline_mode<synchronous>, transform_indices = @transform_1, window_bounds = array<i64: 96, 32>}, {transform_indices = @transform_2, window_bounds = array<i64: 1, 8, 32>}, {transform_indices = @transform_3, window_bounds = array<i64: 1, 8, 32>}, {transform_indices = @transform_4, window_bounds = array<i64: 1, 8, 32>}]} {
    %c0 = arith.constant 0 : index
    %c0_0 = arith.constant 0 : index
    %c0_1 = arith.constant 0 : index
    %0 = vector.load %arg2[%c0, %c0_0, %c0_1] : memref<1x8x32xbf16, #tpu.memory_space<vmem>>, vector<1x8x32xbf16>
    %1 = vector.shape_cast %0 : vector<1x8x32xbf16> to vector<8x32xbf16>
    %c0_2 = arith.constant 0 : index
    %c0_3 = arith.constant 0 : index
    %2 = vector.load %arg3[%c0_2, %c0_3] : memref<96x32xbf16, #tpu.memory_space<vmem>>, vector<32x32xbf16>
    %cst = arith.constant dense<0.000000e+00> : vector<8x32xf32>
    %3 = tpu.matmul %1, %2, %cst {dimension_numbers = #tpu.dot_dimension_numbers<[1], [1], [0], [0], [0, 0, 1, 0], [], []>} : vector<8x32xbf16>, vector<32x32xbf16>, vector<8x32xf32> -> vector<8x32xf32>
    %4 = arith.truncf %3 : vector<8x32xf32> to vector<8x32xbf16>
    %c0_4 = arith.constant 0 : index
    %c0_5 = arith.constant 0 : index
    %c0_6 = arith.constant 0 : index
    %5 = vector.load %arg4[%c0_4, %c0_5, %c0_6] : memref<1x8x32xbf16, #tpu.memory_space<vmem>>, vector<1x8x32xbf16>
    %6 = vector.shape_cast %5 : vector<1x8x32xbf16> to vector<8x32xbf16>
    %7 = vector.shape_cast %4 : vector<8x32xbf16> to vector<1x8x32xbf16>
    tpu.vector_store %arg4[%c0_4, %c0_5, %c0_6], %7 {strides = array<i32>} : memref<1x8x32xbf16, #tpu.memory_space<vmem>>, vector<1x8x32xbf16>,
    %c32 = arith.constant 32 : index
    %c0_7 = arith.constant 0 : index
    %8 = vector.load %arg3[%c32, %c0_7] : memref<96x32xbf16, #tpu.memory_space<vmem>>, vector<32x32xbf16>
    %cst_8 = arith.constant dense<0.000000e+00> : vector<8x32xf32>
    %9 = tpu.matmul %1, %8, %cst_8 {dimension_numbers = #tpu.dot_dimension_numbers<[1], [1], [0], [0], [0, 0, 1, 0], [], []>} : vector<8x32xbf16>, vector<32x32xbf16>, vector<8x32xf32> -> vector<8x32xf32>
    %10 = arith.truncf %9 : vector<8x32xf32> to vector<8x32xbf16>
    %c0_9 = arith.constant 0 : index
    %c0_10 = arith.constant 0 : index
    %c0_11 = arith.constant 0 : index
    %11 = vector.load %arg5[%c0_9, %c0_10, %c0_11] : memref<1x8x32xbf16, #tpu.memory_space<vmem>>, vector<1x8x32xbf16>
    %12 = vector.shape_cast %11 : vector<1x8x32xbf16> to vector<8x32xbf16>
    %13 = vector.shape_cast %10 : vector<8x32xbf16> to vector<1x8x32xbf16>
    tpu.vector_store %arg5[%c0_9, %c0_10, %c0_11], %13 {strides = array<i32>} : memref<1x8x32xbf16, #tpu.memory_space<vmem>>, vector<1x8x32xbf16>,
    %c64 = arith.constant 64 : index
    %c0_12 = arith.constant 0 : index
    %14 = vector.load %arg3[%c64, %c0_12] : memref<96x32xbf16, #tpu.memory_space<vmem>>, vector<32x32xbf16>
    %cst_13 = arith.constant dense<0.000000e+00> : vector<8x32xf32>
    %15 = tpu.matmul %1, %14, %cst_13 {dimension_numbers = #tpu.dot_dimension_numbers<[1], [1], [0], [0], [0, 0, 1, 0], [], []>} : vector<8x32xbf16>, vector<32x32xbf16>, vector<8x32xf32> -> vector<8x32xf32>
    %16 = arith.truncf %15 : vector<8x32xf32> to vector<8x32xbf16>
    %c0_14 = arith.constant 0 : index
    %c0_15 = arith.constant 0 : index
    %c0_16 = arith.constant 0 : index
    %17 = vector.load %arg6[%c0_14, %c0_15, %c0_16] : memref<1x8x32xbf16, #tpu.memory_space<vmem>>, vector<1x8x32xbf16>
    %18 = vector.shape_cast %17 : vector<1x8x32xbf16> to vector<8x32xbf16>
    %19 = vector.shape_cast %16 : vector<8x32xbf16> to vector<1x8x32xbf16>
    tpu.vector_store %arg6[%c0_14, %c0_15, %c0_16], %19 {strides = array<i32>} : memref<1x8x32xbf16, #tpu.memory_space<vmem>>, vector<1x8x32xbf16>,
    return
  }
  func.func @transform_0(%arg0: i32, %arg1: i32) -> (i32, i32, i32) {
    %c0_i32 = arith.constant 0 : i32
    %c0_i32_0 = arith.constant 0 : i32
    return %arg0, %arg1, %c0_i32 : i32, i32, i32
  }
  func.func @transform_1(%arg0: i32, %arg1: i32) -> (i32, i32) {
    %c0_i32 = arith.constant 0 : i32
    %c0_i32_0 = arith.constant 0 : i32
    %c0_i32_1 = arith.constant 0 : i32
    return %c0_i32, %c0_i32_0 : i32, i32
  }
  func.func @transform_2(%arg0: i32, %arg1: i32) -> (i32, i32, i32) {
    %c0_i32 = arith.constant 0 : i32
    %c0_i32_0 = arith.constant 0 : i32
    return %arg0, %arg1, %c0_i32 : i32, i32, i32
  }
  func.func @transform_3(%arg0: i32, %arg1: i32) -> (i32, i32, i32) {
    %c0_i32 = arith.constant 0 : i32
    %c0_i32_0 = arith.constant 0 : i32
    return %arg0, %arg1, %c0_i32 : i32, i32, i32
  }
  func.func @transform_4(%arg0: i32, %arg1: i32) -> (i32, i32, i32) {
    %c0_i32 = arith.constant 0 : i32
    %c0_i32_0 = arith.constant 0 : i32
    return %arg0, %arg1, %c0_i32 : i32, i32, i32
  }
}

</mosaic_0001>

<llo_original>
// kernel: tpu_custom_call.1
$region0: #{tpu_custom_call.1}
  #allocation0 [shape = 'u32[]', space=smem, size = 0x4, offset = 0x4, fixed_abs, tag = 'smem constant byte address 0x4 - core index']
  #allocation1 [shape = 'u32[72,128]{1,0:T(1,128)}', space=vmem, size = 0x9000, scoped, tag = 'internal scratch']
  %s0 = inlined_call_operand.vmem [shape: bf16[2,8,32], index: 0, kind: input, shape index: {}]
  %s1 = inlined_call_operand.vmem [shape: bf16[96,32], index: 1, kind: input, shape index: {}]
  %s2 = inlined_call_operand.hbm [shape: bf16[2,8,32], index: 2, kind: output, shape index: {0}]
  %s3 = inlined_call_operand.hbm [shape: bf16[2,8,32], index: 3, kind: output, shape index: {1}]
  %s4 = inlined_call_operand.hbm [shape: bf16[2,8,32], index: 4, kind: output, shape index: {2}]
  %5 = xla_tuple %s2, %s3, %s4
  %s6 = sld [smem:[#allocation0]]
  $region57: #{tpu_custom_call.1} parent=0
    _
  %s8 = ssub.s32 1, %s6
  %s9 = scalar_select 0, %s8, %s6
  $region1: #{tpu_custom_call.1} parent=0
    #allocation2 [shape = 'u8[4096]{0}', space=vmem, size = 0x1000, scoped, tag = 'output window, operand 0']
    #allocation3 [shape = 's32[2]{0}', space=sflag, size = 0x8, scoped, tag = 'scoped memory for tpu_custom_call.1']
    #allocation4 [shape = 'u8[4096]{0}', space=vmem, size = 0x1000, scoped, tag = 'output window, operand 1']
    #allocation5 [shape = 's32[2]{0}', space=sflag, size = 0x8, scoped, tag = 'scoped memory for tpu_custom_call.1']
    #allocation6 [shape = 'u8[4096]{0}', space=vmem, size = 0x1000, scoped, tag = 'output window, operand 2']
    %10 = vsyncpa [#allocation3], 0
    %s11 = scalar_lea.sflag [#allocation3], 1
    %12 = vsyncpa %s11, 0
    %13 = vsyncpa [#allocation5], 0
    %s14 = scalar_lea.sflag [#allocation5], 1
    %15 = vsyncpa %s14, 0
    loop: start=0, step=1, limit=4
    $region2: #{tpu_custom_call.1} parent=1 // loop_pre_header
      _
    $region3: #{tpu_custom_call.1} parent=1 // loop_header
      %s17 = sphi 0, %s21
      %p18 = scmp.ge.s32.totalorder %s17, 4
      %s24 = sphi 0, %s36
      %s25 = sphi 0, %s32
      %s26 = sphi 0, %s24
      %s27 = sphi 0, %s25
      %s28 = sphi 0, %s26
      %s29 = sphi 0, %s27
      %s41 = sphi 0, %s43
      %s44 = sphi 0, %s41
      %s45 = sphi 0, %s44
      %s61 = sphi 0, %s45
      %s65 = sphi 0, %s65
      %s67 = sphi 0, %s65
      %s68 = sphi 0, %s67
      %s82 = sphi 0, %s68
      %s90 = sphi 0, %s92
      %s93 = sphi 0, %s90
      %s94 = sphi 0, %s93
      %s110 = sphi 0, %s94
      %s118 = sphi 0, %s120
      %s121 = sphi 0, %s118
      %s122 = sphi 0, %s121
      %s138 = sphi 0, %s122
      %s146 = sphi 0, %s148
      %s149 = sphi 0, %s146
      %s150 = sphi 0, %s149
      %s166 = sphi 0, %s150
    $region4: #{tpu_custom_call.1} parent=1 // loop_header_branch
      %20 = sbr.rel (%p18) target = $region8
    $region5: #{tpu_custom_call.1} parent=1 // loop_body
      %s22 = ssub.s32 %s17, 1
      %s23 = ssub.s32 %s17, 2
      %s30 = sadd.s32 1, %s25
      %p31 = scmp.ge.s32.totalorder %s30, 1
      %s32 = scalar_select %p31, 0, %s30
      %s33 = sadd.s32 1, %s24
      %s34 = scalar_select %p31, %s33, %s24
      %p35 = scmp.ge.s32.totalorder %s34, 2
      %s36 = scalar_select %p35, 0, %s34
      %s37 = ssub.s32 %s24, %s36
      %s38 = ssub.s32 %s25, %s32
      %s39 = sor.u32 %s37, %s38
      %p40 = scmp.eq.s32.totalorder %s39, 0
      %s42 = sadd.s32 %s41, 1
      %s43 = scalar_select %p40, %s41, %s42
      %p46 = pneg %p40
      %p47 = scmp.eq.s32.totalorder %s17, 1
      %p48 = por %p46, %p47
      %p49 = scmp.ne.s32.totalorder %s41, %s44
      %p50 = scmp.eq.s32.totalorder %s17, 0
      %p51 = por %p49, %p50
      %p52 = scmp.ne.s32.totalorder %s41, %s44
      %p53 = scmp.eq.s32.totalorder %s22, 1
      %p54 = por %p52, %p53
      %p55 = scmp.ne.s32.totalorder %s44, %s45
      %p56 = scmp.eq.s32.totalorder %s22, 0
      %p57 = por %p55, %p56
      %p58 = scmp.ne.s32.totalorder %s44, %s45
      %p59 = scmp.eq.s32.totalorder %s23, 1
      %p60 = por %p58, %p59
      %p62 = scmp.ne.s32.totalorder %s45, %s61
      %p63 = scmp.eq.s32.totalorder %s23, 0
      %p64 = por %p62, %p63
      %s66 = sadd.s32 %s65, 1
      %p69 = scmp.eq.s32.totalorder %s17, 1
      %p70 = scmp.ne.s32.totalorder %s65, %s67
      %p71 = scmp.eq.s32.totalorder %s17, 0
      %p72 = por %p70, %p71
      %p73 = scmp.ne.s32.totalorder %s65, %s67
      %p74 = scmp.eq.s32.totalorder %s22, 1
      %p75 = por %p73, %p74
      %p76 = scmp.ne.s32.totalorder %s67, %s68
      %p77 = scmp.eq.s32.totalorder %s22, 0
      %p78 = por %p76, %p77
      %p79 = scmp.ne.s32.totalorder %s67, %s68
      %p80 = scmp.eq.s32.totalorder %s23, 1
      %p81 = por %p79, %p80
      %p83 = scmp.ne.s32.totalorder %s68, %s82
      %p84 = scmp.eq.s32.totalorder %s23, 0
      %p85 = por %p83, %p84
      %s86 = ssub.s32 %s24, %s36
      %s87 = ssub.s32 %s25, %s32
      %s88 = sor.u32 %s86, %s87
      %p89 = scmp.eq.s32.totalorder %s88, 0
      %s91 = sadd.s32 %s90, 1
      %s92 = scalar_select %p89, %s90, %s91
      %p95 = pneg %p89
      %p96 = scmp.eq.s32.totalorder %s17, 1
      %p97 = por %p95, %p96
      %p98 = scmp.ne.s32.totalorder %s90, %s93
      %p99 = scmp.eq.s32.totalorder %s17, 0
      %p100 = por %p98, %p99
      %p101 = scmp.ne.s32.totalorder %s90, %s93
      %p102 = scmp.eq.s32.totalorder %s22, 1
      %p103 = por %p101, %p102
      %p104 = scmp.ne.s32.totalorder %s93, %s94
      %p105 = scmp.eq.s32.totalorder %s22, 0
      %p106 = por %p104, %p105
      %p107 = scmp.ne.s32.totalorder %s93, %s94
      %p108 = scmp.eq.s32.totalorder %s23, 1
      %p109 = por %p107, %p108
      %p111 = scmp.ne.s32.totalorder %s94, %s110
      %p112 = scmp.eq.s32.totalorder %s23, 0
      %p113 = por %p111, %p112
      %s114 = ssub.s32 %s24, %s36
      %s115 = ssub.s32 %s25, %s32
      %s116 = sor.u32 %s114, %s115
      %p117 = scmp.eq.s32.totalorder %s116, 0
      %s119 = sadd.s32 %s118, 1
      %s120 = scalar_select %p117, %s118, %s119
      %p123 = pneg %p117
      %p124 = scmp.eq.s32.totalorder %s17, 1
      %p125 = por %p123, %p124
      %p126 = scmp.ne.s32.totalorder %s118, %s121
      %p127 = scmp.eq.s32.totalorder %s17, 0
      %p128 = por %p126, %p127
      %p129 = scmp.ne.s32.totalorder %s118, %s121
      %p130 = scmp.eq.s32.totalorder %s22, 1
      %p131 = por %p129, %p130
      %p132 = scmp.ne.s32.totalorder %s121, %s122
      %p133 = scmp.eq.s32.totalorder %s22, 0
      %p134 = por %p132, %p133
      %p135 = scmp.ne.s32.totalorder %s121, %s122
      %p136 = scmp.eq.s32.totalorder %s23, 1
      %p137 = por %p135, %p136
      %p139 = scmp.ne.s32.totalorder %s122, %s138
      %p140 = scmp.eq.s32.totalorder %s23, 0
      %p141 = por %p139, %p140
      %s142 = ssub.s32 %s24, %s36
      %s143 = ssub.s32 %s25, %s32
      %s144 = sor.u32 %s142, %s143
      %p145 = scmp.eq.s32.totalorder %s144, 0
      %s147 = sadd.s32 %s146, 1
      %s148 = scalar_select %p145, %s146, %s147
      %p151 = pneg %p145
      %p152 = scmp.eq.s32.totalorder %s17, 1
      %p153 = por %p151, %p152
      %p154 = scmp.ne.s32.totalorder %s146, %s149
      %p155 = scmp.eq.s32.totalorder %s17, 0
      %p156 = por %p154, %p155
      %p157 = scmp.ne.s32.totalorder %s146, %s149
      %p158 = scmp.eq.s32.totalorder %s22, 1
      %p159 = por %p157, %p158
      %p160 = scmp.ne.s32.totalorder %s149, %s150
      %p161 = scmp.eq.s32.totalorder %s22, 0
      %p162 = por %p160, %p161
      %p163 = scmp.ne.s32.totalorder %s149, %s150
      %p164 = scmp.eq.s32.totalorder %s23, 1
      %p165 = por %p163, %p164
      %p167 = scmp.ne.s32.totalorder %s150, %s166
      %p168 = scmp.eq.s32.totalorder %s23, 0
      %p169 = por %p167, %p168
      %p170 = scmp.le.s32.totalorder 1, %s17
      %p171 = scmp.lt.s32.totalorder %s17, 3
      %p172 = pnand %p170, %p171
      %p173 = pneg %p172
      // Predicated region
      $region9: #{tpu_custom_call.1} parent=5 // pred_check
        _
      $region10: #{tpu_custom_call.1} parent=5 // pred_check_branch
        %175 = sbr.rel (%p172) target = $region12
      $region11: #{tpu_custom_call.1} parent=5 // pred_region
        %s176 = ssub.s32 %s17, 1
        // Predicated region
        $region13: #{tpu_custom_call.1} parent=11 // pred_check
          %p177 = pneg %p78
        $region14: #{tpu_custom_call.1} parent=11 // pred_check_branch
          %179 = sbr.rel (%p177) target = $region16
        $region15: #{tpu_custom_call.1} parent=11 // pred_region
          _
        $region16: #{tpu_custom_call.1} parent=11 // pred_fallthru
          _
      $region12: #{tpu_custom_call.1} parent=5 // pred_fallthru
        _
      %p180 = scmp.lt.s32.totalorder %s17, 2
      // Predicated region
      $region17: #{tpu_custom_call.1} parent=5 // pred_check
        %p181 = pneg %p180
      $region18: #{tpu_custom_call.1} parent=5 // pred_check_branch
        %183 = sbr.rel (%p181) target = $region20
      $region19: #{tpu_custom_call.1} parent=5 // pred_region
        // Predicated region
        $region21: #{tpu_custom_call.1} parent=19 // pred_check
          %p184 = pneg %p51
        $region22: #{tpu_custom_call.1} parent=19 // pred_check_branch
          %186 = sbr.rel (%p184) target = $region24
        $region23: #{tpu_custom_call.1} parent=19 // pred_region
          %p187 = scmp.lt.s32.totalorder %s24, 1
          %s188 = scalar_select %p187, %s24, 1
          %p189 = scmp.lt.s32.totalorder %s25, 0
          %s190 = scalar_select %p189, %s25, 0
          %s191 = sadd.s32 %s190, %s188
          %s192 = smul.addr %s191, 4
          %s193 = scalar_lea.vmem %s0, %s192
        $region24: #{tpu_custom_call.1} parent=19 // pred_fallthru
          _
      $region20: #{tpu_custom_call.1} parent=5 // pred_fallthru
        _
      %p194 = scmp.le.s32.totalorder 1, %s17
      %p195 = scmp.lt.s32.totalorder %s17, 3
      %p196 = pnand %p194, %p195
      %p197 = pneg %p196
      // Predicated region
      $region25: #{tpu_custom_call.1} parent=5 // pred_check
        _
      $region26: #{tpu_custom_call.1} parent=5 // pred_check_branch
        %199 = sbr.rel (%p196) target = $region28
      $region27: #{tpu_custom_call.1} parent=5 // pred_region
        %s200 = ssub.s32 %s17, 1
        %p201 = scmp.lt.s32.totalorder %s26, 1
        %s202 = scalar_select %p201, %s26, 1
        %p203 = scmp.lt.s32.totalorder %s27, 0
        %s204 = scalar_select %p203, %s27, 0
        %s205 = sadd.s32 %s204, %s202
        %s206 = smul.addr %s205, 4
        %s207 = scalar_lea.vmem %s0, %s206
        %p208 = pneg %p57
        %p209 = pneg %p54
        %p210 = pneg %p78
        %p211 = pneg %p75
        %p212 = pneg %p106
        %p213 = pneg %p103
        %s214 = sand.u32 %s93, 1
        %s215 = scalar_lea.sflag [#allocation3], %s214
        %s216 = sand.u32 %s93, 1
        %s217 = smul.addr %s216, 4
        %s218 = scalar_lea.vmem [#allocation2], %s217
        %p219 = pneg %p134
        %p220 = pneg %p131
        %s221 = sand.u32 %s22, 1
        %s222 = scalar_lea.sflag [#allocation5], %s221
        %s223 = sand.u32 %s121, 1
        %s224 = smul.addr %s223, 4
        %s225 = scalar_lea.vmem [#allocation4], %s224
        %p226 = pneg %p162
        %p227 = pneg %p159
        %s228 = sand.u32 %s22, 1
        %s229 = scalar_lea.sflag [#allocation5], %s228
        %s230 = sand.u32 %s149, 1
        %s231 = smul.addr %s230, 4
        %s232 = scalar_lea.vmem [#allocation6], %s231
        %p233 = scmp.lt.s32.totalorder %s26, 1
        %s234 = scalar_select %p233, %s26, 1
        %p235 = scmp.lt.s32.totalorder %s27, 0
        %s236 = scalar_select %p235, %s27, 0
        %s237 = sadd.s32 %s236, %s234
        %s238 = smul.addr %s237, 4
        %s239 = scalar_lea.vmem %s0, %s238
        %v241 = vld [vmem:[%s239] sm:$0xf]
        %v242 = vld [vmem:[%s1] sm:$0xf]
        %v243 = vld [vmem:[%s1 + $0x4] sm:$0xf]
        %v244 = vld [vmem:[%s1 + $0x8] sm:$0xf]
        %v245 = vld [vmem:[%s1 + $0xc] sm:$0xf]
        %v250 = vunpack.c.l.b16 %v242
        %v251 = vunpack.c.l.b16 %v243
        %v252 = vunpack.c.l.b16 %v244
        %v253 = vunpack.c.l.b16 %v245
        %v254 = vpack.c.b16 %v251, %v250
        %v255 = vpack.c.b16 %v253, %v252
        %vm256 = vcmask 261120
        %v258 = vsel %vm256, %v241, 0
        %v261 = vsel %vm256, %v254, 0
        %v264 = vsel %vm256, %v255, 0
        %266 = vmatpush.bf16.xpose.msra.mxu0 0
        %267 = vmatpush.bf16.xpose.msra.mxu0 0
        %268 = vmatpush.bf16.xpose.msra.mxu0 0
        %269 = vmatpush.bf16.xpose.msra.mxu0 0
        %270 = vmatpush.bf16.xpose.msra.mxu0 0
        %271 = vmatpush.bf16.xpose.msra.mxu0 0
        %272 = vmatpush.bf16.xpose.msra.mxu0 %v264
        %273 = vmatpush.bf16.xpose.msra.mxu0 %v261
        %274 = vmatmul.bf16.gmra.mxu0 %v258
        %v275 = vpop.f32.mrf.mxu0
        %v276 = vadd.f32 0.0, %v275
        %v277 = vpop.f32.mrf.mxu0
        %278 = vdwg.mxu0
        %v279 = vpack.c.bf16 %v276, %v276
        %vm280 = vcmask 257024
        %281 = vst.msk [vmem:[%s218] sm:$0xf] %vm280, %v279
        %v282 = vld [vmem:[%s1 + $0x10] sm:$0xf]
        %v283 = vld [vmem:[%s1 + $0x14] sm:$0xf]
        %v284 = vld [vmem:[%s1 + $0x18] sm:$0xf]
        %v285 = vld [vmem:[%s1 + $0x1c] sm:$0xf]
        %v290 = vunpack.c.l.b16 %v282
        %v291 = vunpack.c.l.b16 %v283
        %v292 = vunpack.c.l.b16 %v284
        %v293 = vunpack.c.l.b16 %v285
        %v294 = vpack.c.b16 %v291, %v290
        %v295 = vpack.c.b16 %v293, %v292
        %v297 = vsel %vm256, %v294, 0
        %v300 = vsel %vm256, %v295, 0
        %302 = vmatpush.bf16.xpose.msra.mxu0 0
        %303 = vmatpush.bf16.xpose.msra.mxu0 0
        %304 = vmatpush.bf16.xpose.msra.mxu0 0
        %305 = vmatpush.bf16.xpose.msra.mxu0 0
        %306 = vmatpush.bf16.xpose.msra.mxu0 0
        %307 = vmatpush.bf16.xpose.msra.mxu0 0
        %308 = vmatpush.bf16.xpose.msra.mxu0 %v300
        %309 = vmatpush.bf16.xpose.msra.mxu0 %v297
        %310 = vmatmul.bf16.gmra.mxu0 %v258
        %v311 = vpop.f32.mrf.mxu0
        %v312 = vadd.f32 0.0, %v311
        %v313 = vpop.f32.mrf.mxu0
        %314 = vdwg.mxu0
        %v315 = vpack.c.bf16 %v312, %v312
        %316 = vst.msk [vmem:[%s225] sm:$0xf] %vm280, %v315
        %v317 = vld [vmem:[%s1 + $0x20] sm:$0xf]
        %v318 = vld [vmem:[%s1 + $0x24] sm:$0xf]
        %v319 = vld [vmem:[%s1 + $0x28] sm:$0xf]
        %v320 = vld [vmem:[%s1 + $0x2c] sm:$0xf]
        %v325 = vunpack.c.l.b16 %v317
        %v326 = vunpack.c.l.b16 %v318
        %v327 = vunpack.c.l.b16 %v319
        %v328 = vunpack.c.l.b16 %v320
        %v329 = vpack.c.b16 %v326, %v325
        %v330 = vpack.c.b16 %v328, %v327
        %v332 = vsel %vm256, %v329, 0
        %v335 = vsel %vm256, %v330, 0
        %337 = vmatpush.bf16.xpose.msra.mxu0 0
        %338 = vmatpush.bf16.xpose.msra.mxu0 0
        %339 = vmatpush.bf16.xpose.msra.mxu0 0
        %340 = vmatpush.bf16.xpose.msra.mxu0 0
        %341 = vmatpush.bf16.xpose.msra.mxu0 0
        %342 = vmatpush.bf16.xpose.msra.mxu0 0
        %343 = vmatpush.bf16.xpose.msra.mxu0 %v335
        %344 = vmatpush.bf16.xpose.msra.mxu0 %v332
        %345 = vmatmul.bf16.gmra.mxu0 %v258
        %v346 = vpop.f32.mrf.mxu0
        %v347 = vadd.f32 0.0, %v346
        %v348 = vpop.f32.mrf.mxu0
        %349 = vdwg.mxu0
        %v350 = vpack.c.bf16 %v347, %v347
        %351 = vst.msk [vmem:[%s232] sm:$0xf] %vm280, %v350
        %s352 = sand.u32 %s93, 1
        %s353 = scalar_lea.sflag [#allocation3], %s352
        %s354 = sand.u32 %s93, 1
        %s355 = smul.addr %s354, 4
        %s356 = scalar_lea.vmem [#allocation2], %s355
        %s357 = sand.u32 %s22, 1
        %s358 = scalar_lea.sflag [#allocation5], %s357
        %s359 = sand.u32 %s121, 1
        %s360 = smul.addr %s359, 4
        %s361 = scalar_lea.vmem [#allocation4], %s360
        %s362 = sand.u32 %s22, 1
        %s363 = scalar_lea.sflag [#allocation5], %s362
        %s364 = sand.u32 %s149, 1
        %s365 = smul.addr %s364, 4
        %s366 = scalar_lea.vmem [#allocation6], %s365
        // Predicated region
        $region29: #{tpu_custom_call.1} parent=27 // pred_check
          %p367 = pneg %p103
        $region30: #{tpu_custom_call.1} parent=27 // pred_check_branch
          %369 = sbr.rel (%p367) target = $region32
        $region31: #{tpu_custom_call.1} parent=27 // pred_region
          %371 = vsyncadd %s353, 0
          %s372 = sadd.s32 %s27, %s26
          %s373 = smul.addr %s372, 4
          %s374 = scalar_lea.hbm %s2, %s373
          %s376 = sshll.u32 %s356, 4
          %s377 = int_to_ptr.vmem [resolvable:$true] %s376
          %s378 = sshll.u32 %s374, 4
          %s379 = int_to_ptr.hbm [resolvable:$true] %s378
          %381 = dma.vmem_to_hbm [thread:$0]  %s377, 64, %s379, %s353
        $region32: #{tpu_custom_call.1} parent=27 // pred_fallthru
          _
        // Predicated region
        $region33: #{tpu_custom_call.1} parent=27 // pred_check
          %p382 = pneg %p131
        $region34: #{tpu_custom_call.1} parent=27 // pred_check_branch
          %384 = sbr.rel (%p382) target = $region36
        $region35: #{tpu_custom_call.1} parent=27 // pred_region
          %386 = vsyncadd %s358, 0
          %s387 = sadd.s32 %s27, %s26
          %s388 = smul.addr %s387, 4
          %s389 = scalar_lea.hbm %s3, %s388
          %s391 = sshll.u32 %s361, 4
          %s392 = int_to_ptr.vmem [resolvable:$true] %s391
          %s393 = sshll.u32 %s389, 4
          %s394 = int_to_ptr.hbm [resolvable:$true] %s393
          %396 = dma.vmem_to_hbm [thread:$0]  %s392, 64, %s394, %s358
        $region36: #{tpu_custom_call.1} parent=27 // pred_fallthru
          _
        // Predicated region
        $region37: #{tpu_custom_call.1} parent=27 // pred_check
          %p397 = pneg %p159
        $region38: #{tpu_custom_call.1} parent=27 // pred_check_branch
          %399 = sbr.rel (%p397) target = $region40
        $region39: #{tpu_custom_call.1} parent=27 // pred_region
          %401 = vsyncadd %s363, 0
          %s402 = sadd.s32 %s27, %s26
          %s403 = smul.addr %s402, 4
          %s404 = scalar_lea.hbm %s4, %s403
          %s406 = sshll.u32 %s366, 4
          %s407 = int_to_ptr.vmem [resolvable:$true] %s406
          %s408 = sshll.u32 %s404, 4
          %s409 = int_to_ptr.hbm [resolvable:$true] %s408
          %411 = dma.vmem_to_hbm [thread:$0]  %s407, 64, %s409, %s363
        $region40: #{tpu_custom_call.1} parent=27 // pred_fallthru
          _
      $region28: #{tpu_custom_call.1} parent=5 // pred_fallthru
        _
      %p412 = scmp.le.s32.totalorder 2, %s17
      // Predicated region
      $region41: #{tpu_custom_call.1} parent=5 // pred_check
        %p413 = pneg %p412
      $region42: #{tpu_custom_call.1} parent=5 // pred_check_branch
        %415 = sbr.rel (%p413) target = $region44
      $region43: #{tpu_custom_call.1} parent=5 // pred_region
        %s416 = ssub.s32 %s17, 2
        // Predicated region
        $region45: #{tpu_custom_call.1} parent=43 // pred_check
          %p417 = pneg %p109
        $region46: #{tpu_custom_call.1} parent=43 // pred_check_branch
          %419 = sbr.rel (%p417) target = $region48
        $region47: #{tpu_custom_call.1} parent=43 // pred_region
          %s420 = sand.u32 %s94, 1
          %s421 = scalar_lea.sflag [#allocation3], %s420
          %s422 = sand.u32 %s94, 1
          %s423 = smul.addr %s422, 4
          %s424 = scalar_lea.vmem [#allocation2], %s423
          %426 = dma.done %s421, 64
        $region48: #{tpu_custom_call.1} parent=43 // pred_fallthru
          _
        // Predicated region
        $region49: #{tpu_custom_call.1} parent=43 // pred_check
          %p427 = pneg %p137
        $region50: #{tpu_custom_call.1} parent=43 // pred_check_branch
          %429 = sbr.rel (%p427) target = $region52
        $region51: #{tpu_custom_call.1} parent=43 // pred_region
          %s430 = sand.u32 %s23, 1
          %s431 = scalar_lea.sflag [#allocation5], %s430
          %s432 = sand.u32 %s122, 1
          %s433 = smul.addr %s432, 4
          %s434 = scalar_lea.vmem [#allocation4], %s433
          %436 = dma.done %s431, 64
        $region52: #{tpu_custom_call.1} parent=43 // pred_fallthru
          _
        // Predicated region
        $region53: #{tpu_custom_call.1} parent=43 // pred_check
          %p437 = pneg %p165
        $region54: #{tpu_custom_call.1} parent=43 // pred_check_branch
          %439 = sbr.rel (%p437) target = $region56
        $region55: #{tpu_custom_call.1} parent=43 // pred_region
          %s440 = sand.u32 %s23, 1
          %s441 = scalar_lea.sflag [#allocation5], %s440
          %s442 = sand.u32 %s150, 1
          %s443 = smul.addr %s442, 4
          %s444 = scalar_lea.vmem [#allocation6], %s443
          %446 = dma.done %s441, 64
        $region56: #{tpu_custom_call.1} parent=43 // pred_fallthru
          _
      $region44: #{tpu_custom_call.1} parent=5 // pred_fallthru
        _
    $region6: #{tpu_custom_call.1} parent=1 // loop_footer
      %s21 = sadd.s32 1, %s17
    $region7: #{tpu_custom_call.1} parent=1 // loop_footer_branch
      %16 = sbr.rel target = $region3
    $region8: #{tpu_custom_call.1} parent=1 // loop_exit
      _
    %447 = vsyncpa [#allocation3], 1
    %s448 = scalar_lea.sflag [#allocation3], 1
    %449 = vsyncpa %s448, 1
    %450 = vsyncpa [#allocation5], 1
    %s451 = scalar_lea.sflag [#allocation5], 1
    %452 = vsyncpa %s451, 1

</llo_original>
